<compile_context>
chip_gen: v5e
topology: v5e:2x2
jax: 0.10.0
libtpu: 0.0.40
codegen_flags: <defaults>
</compile_context>

<pallas_src>
import functools

import numpy as np
import jax
import jax.numpy as jnp
from jax.experimental import pallas as pl
from jax.experimental.pallas import tpu as pltpu


def _dino_loss_kernel(scalars_ref, student_ref, teacher_ref, center_ref,
                      loss_ref, center_sum_ref,
                      loss_acc_ref, center_acc_ref, *, ncrops, fold):
    """One batch tile: student (ncrops, tb, D), teacher (2, tb, D)."""
    step = pl.program_id(1)                 # inner (batch-tile) axis
    last = pl.num_programs(1) - 1
    tb = student_ref.shape[1]
    out_dim = student_ref.shape[2]

    # scalars: [student_temp, teacher_temp(epoch)] in SMEM
    inv_student_temp = 1.0 / scalars_ref[0]
    inv_teacher_temp = 1.0 / scalars_ref[1]

    @pl.when(step == 0)
    def _init():
        loss_acc_ref[...] = jnp.zeros_like(loss_acc_ref)
        center_acc_ref[...] = jnp.zeros_like(center_acc_ref)

    center = center_ref[...].astype(jnp.float32)                       # (1, D)

    # ---- teacher softmax numerators (unnormalized) + exact inverse row sums ----
    t0_raw = teacher_ref[0].astype(jnp.float32)                        # (tb, D)
    t1_raw = teacher_ref[1].astype(jnp.float32)
    t0 = (t0_raw - center) * inv_teacher_temp
    t1 = (t1_raw - center) * inv_teacher_temp
    t0_exp = jnp.exp(t0 - jnp.max(t0, axis=-1, keepdims=True))
    t1_exp = jnp.exp(t1 - jnp.max(t1, axis=-1, keepdims=True))
    t0_inv = pl.reciprocal(jnp.sum(t0_exp, axis=-1, keepdims=True))    # (tb, 1)
    t1_inv = pl.reciprocal(jnp.sum(t1_exp, axis=-1, keepdims=True))    # (tb, 1)

    # ---- student log-softmax, one crop at a time (no (ncrops, tb, D) temps) ----
    def _shifted_logits_and_lse(v):
        sv = student_ref[v].astype(jnp.float32) * inv_student_temp     # (tb, D)
        sv_shift = sv - jnp.max(sv, axis=-1, keepdims=True)
        lse_v = jnp.log(jnp.sum(jnp.exp(sv_shift), axis=-1, keepdims=True))
        return sv_shift, lse_v

    s_shift0, lse0 = _shifted_logits_and_lse(0)
    s_shift1, lse1 = _shifted_logits_and_lse(1)
    s_shift_sum = s_shift0 + s_shift1                                   # (tb, D)
    lse_sum = lse0 + lse1                                               # (tb, 1)
    for v in range(2, ncrops):
        sv_shift, lse_v = _shifted_logits_and_lse(v)
        s_shift_sum = s_shift_sum + sv_shift
        lse_sum = lse_sum + lse_v

    # ---- collapsed iq/v double loop ----
    #   sum_{v != iq} logsm[v] = (S_shift - s_shift[iq]) - (lse_sum - lse[iq])
    # and the lse part multiplies a normalized softmax, so it reduces to a
    # per-row constant.
    r0 = jnp.sum(t0_exp * (s_shift_sum - s_shift0), axis=-1, keepdims=True)
    r1 = jnp.sum(t1_exp * (s_shift_sum - s_shift1), axis=-1, keepdims=True)
    per_row = ((t0_inv * r0 - (lse_sum - lse0))
               + (t1_inv * r1 - (lse_sum - lse1)))                      # (tb, 1)
    loss_acc_ref[...] -= per_row          # per-row accumulator; collapse deferred

    # ---- center batch-sum: VPU-only fold to (fold, D); XLU reduce deferred ----
    t_both = t0_raw + t1_raw                                            # (tb, D)
    center_acc_ref[...] += jnp.sum(t_both.reshape(tb // fold, fold, out_dim),
                                   axis=0)                              # (fold, D)

    @pl.when(step == last)
    def _finalize():
        loss_ref[...] = jnp.sum(loss_acc_ref[...], keepdims=True).reshape(1, 1, 1)
        center_sum_ref[...] = jnp.sum(center_acc_ref[...], axis=0,
                                      keepdims=True).reshape(1, 1, out_dim)


@functools.lru_cache(maxsize=1)
def _vmem_params():
    """(vmem_limit_bytes, tile_budget_bytes) tuned per TPU generation."""
    try:
        cap = int(pltpu.get_tpu_info().vmem_capacity_bytes)
    except Exception:
        cap = 64 * 1024 * 1024            # be conservative if the query fails
    if cap >= 96 * 1024 * 1024:           # v5e / v6e: 128 MiB of VMEM per core
        return 64 * 1024 * 1024, 48 * 1024 * 1024
    # v7x: 64 MiB per core -> stay well under the physical limit
    return 40 * 1024 * 1024, 20 * 1024 * 1024


def _pick_batch_tile(batch, ncrops, out_dim, in_itemsize, max_tile, budget_bytes):
    """Largest batch tile whose per-step working set fits the VMEM budget.

    Valid tiles are multiples of 8 dividing `batch` (Mosaic (8,128) rule on the
    second-minor block dim) or `batch` itself.
    """
    if batch % 8 != 0:
        # TODO(synk): pad + pl.when row masking for batches not divisible by 8.
        return batch
    cands = sorted({tb for tb in range(8, batch + 1, 8) if batch % tb == 0})
    # Per batch row: double-buffered input tiles for (ncrops + 2) crops plus
    # ~12 live f32 row-sized temporaries (teacher exps, crop-0/1 shifted rows,
    # per-crop shifted row, running sums) after the crop-loop restructure.
    per_b = (ncrops + 2) * out_dim * 2 * in_itemsize + 12 * out_dim * 4
    fitting = [tb for tb in cands if tb * per_b <= budget_bytes]
    if max_tile is not None:
        capped = [tb for tb in fitting if tb <= max_tile]
        fitting = capped or fitting
    if not fitting:
        # TODO(synk): tile out_dim with an online-softmax formulation for
        # DINO's real out_dim=65536; smallest batch tile is the fallback here.
        return 8
    return max(fitting)


@functools.lru_cache(maxsize=None)
def _build_dino_loss_fn(out_dim, ncrops, batch, tb, ncores, vmem_limit_bytes):
    n_steps = batch // tb
    inner = n_steps // ncores
    fold = 8 if tb % 8 == 0 else 1
    kernel = functools.partial(_dino_loss_kernel, ncrops=ncrops, fold=fold)

    @jax.jit
    def fn(scalars, student, teacher, center):
        return pl.pallas_call(
            kernel,
            out_shape=(
                # per-core partial loss sums and teacher batch-sums
                jax.ShapeDtypeStruct((ncores, 1, 1), jnp.float32),
                jax.ShapeDtypeStruct((ncores, 1, out_dim), jnp.float32),
            ),
            grid=(ncores, inner),
            in_specs=[
                pl.BlockSpec(memory_space=pltpu.MemorySpace.SMEM),          # scalars
                pl.BlockSpec((ncrops, tb, out_dim),
                             lambda c, i: (0, c * inner + i, 0)),            # student
                pl.BlockSpec((2, tb, out_dim),
                             lambda c, i: (0, c * inner + i, 0)),            # teacher
                pl.BlockSpec((1, out_dim), lambda c, i: (0, 0)),             # center
            ],
            out_specs=(
                pl.BlockSpec((1, 1, 1), lambda c, i: (c, 0, 0)),             # loss part
                pl.BlockSpec((1, 1, out_dim), lambda c, i: (c, 0, 0)),       # center sum
            ),
            scratch_shapes=[
                pltpu.VMEM((tb, 1), jnp.float32),     # per-row loss accumulator
                pltpu.VMEM((fold, out_dim), jnp.float32),  # folded teacher batch-sum
            ],
            compiler_params=pltpu.CompilerParams(
                # leading axis: TensorCore split (v7x megacore); inner axis
                # carries the accumulators -> "arbitrary".
                dimension_semantics=("parallel", "arbitrary"),
                vmem_limit_bytes=vmem_limit_bytes,
            ),
        )(scalars, student, teacher, center)

    return fn


class DINOLoss:
    """JAX/Pallas re-implementation of main_dino.py:DINOLoss (forward pass)."""

    def __init__(self, out_dim, ncrops, warmup_teacher_temp, teacher_temp,
                 warmup_teacher_temp_epochs, nepochs, student_temp=0.1,
                 center_momentum=0.9, max_batch_tile=None, input_cast_dtype=None):
        assert ncrops >= 2, "kernel assumes at least 2 student crops"
        self.out_dim = out_dim
        self.ncrops = ncrops
        self.student_temp = student_temp
        self.center_momentum = center_momentum
        self.max_batch_tile = max_batch_tile
        # On HBM-bound v5e, pass input_cast_dtype=jnp.bfloat16 to halve the
        # bytes streamed (kernel computes in f32 either way).
        self.input_cast_dtype = input_cast_dtype
        # buffer: center, deterministically initialized to zeros (as in __init__)
        self.center = jnp.zeros((1, out_dim), jnp.float32)
        self.teacher_temp_schedule = np.concatenate((
            np.linspace(warmup_teacher_temp, teacher_temp,
                        warmup_teacher_temp_epochs),
            np.ones(nepochs - warmup_teacher_temp_epochs) * teacher_temp))

    def __call__(self, student_output, teacher_output, epoch):
        rows_s, D = student_output.shape
        rows_t, _ = teacher_output.shape
        batch = rows_t // 2
        assert rows_t == 2 * batch and rows_s == self.ncrops * batch
        assert D == self.out_dim

        if self.input_cast_dtype is not None:
            student_output = student_output.astype(self.input_cast_dtype)
            teacher_output = teacher_output.astype(self.input_cast_dtype)

        vmem_limit, tile_budget = _vmem_params()
        tb = _pick_batch_tile(batch, self.ncrops, D,
                              jnp.dtype(student_output.dtype).itemsize,
                              self.max_batch_tile, tile_budget)
        n_steps = batch // tb
        # Split batch tiles over both TensorCores when possible (v7x);
        # on 1-TC chips the extra leading axis just runs serially.
        ncores = 2 if (n_steps % 2 == 0 and n_steps >= 2) else 1

        temp = float(self.teacher_temp_schedule[epoch])
        scalars = jnp.array([self.student_temp, temp], jnp.float32)
        fn = _build_dino_loss_fn(D, self.ncrops, batch, tb, ncores, vmem_limit)

        # crop-major row layout -> (ncrops, B, D) / (2, B, D): one grid axis
        # tiles the batch dimension for every crop at once.
        student = student_output.reshape(self.ncrops, batch, D)
        teacher = teacher_output.reshape(2, batch, D)
        loss_parts, center_sums = fn(scalars, student, teacher, self.center)

        n_terms = 2 * (self.ncrops - 1)
        loss = loss_parts.sum() / (batch * n_terms)

        # EMA center update (single device).
        # TODO(synk): multi-device data parallelism needs an all-reduce (psum /
        # remote-DMA ring) of batch_center, like dist.all_reduce in PyTorch.
        batch_center = center_sums.sum(axis=0) / (2.0 * batch)          # (1, D)
        self.center = (self.center * self.center_momentum
                       + batch_center * (1.0 - self.center_momentum))
        return loss


def _reference_loss(student, teacher, center, ncrops, student_temp, temp):
    """Pure-JAX reference matching the PyTorch forward."""
    B = teacher.shape[0] // 2
    s_ls = jax.nn.log_softmax(student.astype(jnp.float32) / student_temp, axis=-1)
    t_sm = jax.nn.softmax((teacher.astype(jnp.float32) - center) / temp, axis=-1)
    total, n = 0.0, 0
    for iq in range(2):
        q = t_sm[iq * B:(iq + 1) * B]
        for v in range(ncrops):
            if v == iq:
                continue
            loss = jnp.sum(-q * s_ls[v * B:(v + 1) * B], axis=-1).mean()
            total, n = total + loss, n + 1
    return total / n


if __name__ == "__main__":
    out_dim, ncrops, batch = 128, 4, 16
    key = jax.random.PRNGKey(0)
    k1, k2 = jax.random.split(key)
    student_output = jax.random.normal(k1, (ncrops * batch, out_dim), jnp.float32)
    teacher_output = jax.random.normal(k2, (2 * batch, out_dim), jnp.float32)

    dino = DINOLoss(out_dim=out_dim, ncrops=ncrops,
                    warmup_teacher_temp=0.04, teacher_temp=0.07,
                    warmup_teacher_temp_epochs=10, nepochs=20,
                    max_batch_tile=8)   # batch=16, tb=8 -> 2 tiles, 2-core split

    epoch = 0
    loss = dino(student_output, teacher_output, epoch)
    jax.block_until_ready(loss)
    jax.block_until_ready(dino.center)

    # correctness check against a pure-JAX reference
    ref_center0 = jnp.zeros((1, out_dim), jnp.float32)
    ref_loss = _reference_loss(student_output, teacher_output, ref_center0,
                               ncrops, 0.1,
                               float(dino.teacher_temp_schedule[epoch]))
    ref_center = (ref_center0 * 0.9
                  + (teacher_output.sum(0, keepdims=True) / (2 * batch)) * 0.1)
    np.testing.assert_allclose(float(loss), float(ref_loss), rtol=1e-4, atol=1e-6)
    np.testing.assert_allclose(np.asarray(dino.center), np.asarray(ref_center),
                               rtol=1e-5, atol=1e-5)

    print("KERNEL_OK")
</pallas_src>

<mosaic_0001>
module attributes {stable_mosaic.version = 11 : i64} {
  func.func @_dino_loss_kernel(%arg0: i32, %arg1: i32, %arg2: memref<2xf32, #tpu.memory_space<smem>>, %arg3: memref<4x8x128xf32, #tpu.memory_space<vmem>>, %arg4: memref<2x8x128xf32, #tpu.memory_space<vmem>>, %arg5: memref<1x128xf32, #tpu.memory_space<vmem>>, %arg6: memref<1x1x1xf32, #tpu.memory_space<vmem>>, %arg7: memref<1x1x128xf32, #tpu.memory_space<vmem>>, %arg8: memref<8x1xf32, #tpu.memory_space<vmem>>, %arg9: memref<8x128xf32, #tpu.memory_space<vmem>>) attributes {dimension_semantics = [#tpu.dimension_semantics<parallel>, #tpu.dimension_semantics<arbitrary>], iteration_bounds = array<i64: 2, 1>, scalar_prefetch = 0 : i64, scratch_operands = 2 : i64, tpu.core_type = #tpu.core_type<tc>, window_params = [{transform_indices = @transform_0, window_bounds = array<i64: 2>}, {transform_indices = @transform_1, window_bounds = array<i64: 4, 8, 128>}, {transform_indices = @transform_2, window_bounds = array<i64: 2, 8, 128>}, {pipeline_mode = #tpu.pipeline_mode<synchronous>, transform_indices = @transform_3, window_bounds = array<i64: 1, 128>}, {transform_indices = @transform_4, window_bounds = array<i64: 1, 1, 1>}, {transform_indices = @transform_5, window_bounds = array<i64: 1, 1, 128>}]} {
    %c0 = arith.constant 0 : index
    %0 = memref.load %arg2[%c0] : memref<2xf32, #tpu.memory_space<smem>>
    %cst = arith.constant 1.000000e+00 : f32
    %1 = arith.divf %cst, %0 : f32
    %c1 = arith.constant 1 : index
    %2 = memref.load %arg2[%c1] : memref<2xf32, #tpu.memory_space<smem>>
    %cst_0 = arith.constant 1.000000e+00 : f32
    %3 = arith.divf %cst_0, %2 : f32
    %c0_i32 = arith.constant 0 : i32
    %4 = arith.cmpi eq, %arg1, %c0_i32 : i32
    %5 = arith.extui %4 : i1 to i32
    %c0_i32_1 = arith.constant 0 : i32
    %6 = arith.cmpi ne, %5, %c0_i32_1 : i32
    scf.if %6 {
      %cst_45 = arith.constant 0.000000e+00 : f32
      %117 = vector.broadcast %cst_45 : f32 to vector<8x1xf32>
      %c0_46 = arith.constant 0 : index
      %c0_47 = arith.constant 0 : index
      %118 = vector.load %arg8[%c0_46, %c0_47] : memref<8x1xf32, #tpu.memory_space<vmem>>, vector<8x1xf32>
      tpu.vector_store %arg8[%c0_46, %c0_47], %117 {strides = array<i32>} : memref<8x1xf32, #tpu.memory_space<vmem>>, vector<8x1xf32>,
      %cst_48 = arith.constant 0.000000e+00 : f32
      %119 = vector.broadcast %cst_48 : f32 to vector<8x128xf32>
      %c0_49 = arith.constant 0 : index
      %c0_50 = arith.constant 0 : index
      %120 = vector.load %arg9[%c0_49, %c0_50] : memref<8x128xf32, #tpu.memory_space<vmem>>, vector<8x128xf32>
      tpu.vector_store %arg9[%c0_49, %c0_50], %119 {strides = array<i32>} : memref<8x128xf32, #tpu.memory_space<vmem>>, vector<8x128xf32>,
    } else {
    }
    %c0_2 = arith.constant 0 : index
    %c0_3 = arith.constant 0 : index
    %7 = vector.load %arg5[%c0_2, %c0_3] : memref<1x128xf32, #tpu.memory_space<vmem>>, vector<1x128xf32>
    %c0_4 = arith.constant 0 : index
    %c0_5 = arith.constant 0 : index
    %c0_6 = arith.constant 0 : index
    %8 = vector.load %arg4[%c0_4, %c0_5, %c0_6] : memref<2x8x128xf32, #tpu.memory_space<vmem>>, vector<1x8x128xf32>
    %9 = vector.shape_cast %8 : vector<1x8x128xf32> to vector<8x128xf32>
    %c1_7 = arith.constant 1 : index
    %c0_8 = arith.constant 0 : index
    %c0_9 = arith.constant 0 : index
    %10 = vector.load %arg4[%c1_7, %c0_8, %c0_9] : memref<2x8x128xf32, #tpu.memory_space<vmem>>, vector<1x8x128xf32>
    %11 = vector.shape_cast %10 : vector<1x8x128xf32> to vector<8x128xf32>
    %12 = vector.broadcast %7 : vector<1x128xf32> to vector<8x128xf32>
    %13 = arith.subf %9, %12 : vector<8x128xf32>
    %14 = vector.broadcast %3 : f32 to vector<8x128xf32>
    %15 = arith.mulf %13, %14 : vector<8x128xf32>
    %16 = vector.broadcast %7 : vector<1x128xf32> to vector<8x128xf32>
    %17 = arith.subf %11, %16 : vector<8x128xf32>
    %18 = vector.broadcast %3 : f32 to vector<8x128xf32>
    %19 = arith.mulf %17, %18 : vector<8x128xf32>
    %cst_10 = arith.constant dense<0xFF800000> : vector<8xf32>
    %20 = vector.multi_reduction <maximumf>, %15, %cst_10 [1] : vector<8x128xf32> to vector<8xf32>
    %21 = vector.shape_cast %20 : vector<8xf32> to vector<8x1xf32>
    %22 = vector.broadcast %21 : vector<8x1xf32> to vector<8x128xf32>
    %23 = arith.subf %15, %22 : vector<8x128xf32>
    %24 = math.exp %23 : vector<8x128xf32>
    %cst_11 = arith.constant dense<0xFF800000> : vector<8xf32>
    %25 = vector.multi_reduction <maximumf>, %19, %cst_11 [1] : vector<8x128xf32> to vector<8xf32>
    %26 = vector.shape_cast %25 : vector<8xf32> to vector<8x1xf32>
    %27 = vector.broadcast %26 : vector<8x1xf32> to vector<8x128xf32>
    %28 = arith.subf %19, %27 : vector<8x128xf32>
    %29 = math.exp %28 : vector<8x128xf32>
    %cst_12 = arith.constant dense<0.000000e+00> : vector<8xf32>
    %30 = vector.multi_reduction <add>, %24, %cst_12 [1] : vector<8x128xf32> to vector<8xf32>
    %31 = vector.shape_cast %30 : vector<8xf32> to vector<8x1xf32>
    %32 = tpu.reciprocal %31 : vector<8x1xf32> -> vector<8x1xf32>
    %cst_13 = arith.constant dense<0.000000e+00> : vector<8xf32>
    %33 = vector.multi_reduction <add>, %29, %cst_13 [1] : vector<8x128xf32> to vector<8xf32>
    %34 = vector.shape_cast %33 : vector<8xf32> to vector<8x1xf32>
    %35 = tpu.reciprocal %34 : vector<8x1xf32> -> vector<8x1xf32>
    %c0_14 = arith.constant 0 : index
    %c0_15 = arith.constant 0 : index
    %c0_16 = arith.constant 0 : index
    %36 = vector.load %arg3[%c0_14, %c0_15, %c0_16] : memref<4x8x128xf32, #tpu.memory_space<vmem>>, vector<1x8x128xf32>
    %37 = vector.shape_cast %36 : vector<1x8x128xf32> to vector<8x128xf32>
    %38 = vector.broadcast %1 : f32 to vector<8x128xf32>
    %39 = arith.mulf %37, %38 : vector<8x128xf32>
    %cst_17 = arith.constant dense<0xFF800000> : vector<8xf32>
    %40 = vector.multi_reduction <maximumf>, %39, %cst_17 [1] : vector<8x128xf32> to vector<8xf32>
    %41 = vector.shape_cast %40 : vector<8xf32> to vector<8x1xf32>
    %42 = vector.broadcast %41 : vector<8x1xf32> to vector<8x128xf32>
    %43 = arith.subf %39, %42 : vector<8x128xf32>
    %44 = math.exp %43 : vector<8x128xf32>
    %cst_18 = arith.constant dense<0.000000e+00> : vector<8xf32>
    %45 = vector.multi_reduction <add>, %44, %cst_18 [1] : vector<8x128xf32> to vector<8xf32>
    %46 = vector.shape_cast %45 : vector<8xf32> to vector<8x1xf32>
    %47 = math.log %46 : vector<8x1xf32>
    %c1_19 = arith.constant 1 : index
    %c0_20 = arith.constant 0 : index
    %c0_21 = arith.constant 0 : index
    %48 = vector.load %arg3[%c1_19, %c0_20, %c0_21] : memref<4x8x128xf32, #tpu.memory_space<vmem>>, vector<1x8x128xf32>
    %49 = vector.shape_cast %48 : vector<1x8x128xf32> to vector<8x128xf32>
    %50 = vector.broadcast %1 : f32 to vector<8x128xf32>
    %51 = arith.mulf %49, %50 : vector<8x128xf32>
    %cst_22 = arith.constant dense<0xFF800000> : vector<8xf32>
    %52 = vector.multi_reduction <maximumf>, %51, %cst_22 [1] : vector<8x128xf32> to vector<8xf32>
    %53 = vector.shape_cast %52 : vector<8xf32> to vector<8x1xf32>
    %54 = vector.broadcast %53 : vector<8x1xf32> to vector<8x128xf32>
    %55 = arith.subf %51, %54 : vector<8x128xf32>
    %56 = math.exp %55 : vector<8x128xf32>
    %cst_23 = arith.constant dense<0.000000e+00> : vector<8xf32>
    %57 = vector.multi_reduction <add>, %56, %cst_23 [1] : vector<8x128xf32> to vector<8xf32>
    %58 = vector.shape_cast %57 : vector<8xf32> to vector<8x1xf32>
    %59 = math.log %58 : vector<8x1xf32>
    %60 = arith.addf %43, %55 : vector<8x128xf32>
    %61 = arith.addf %47, %59 : vector<8x1xf32>
    %c2 = arith.constant 2 : index
    %c0_24 = arith.constant 0 : index
    %c0_25 = arith.constant 0 : index
    %62 = vector.load %arg3[%c2, %c0_24, %c0_25] : memref<4x8x128xf32, #tpu.memory_space<vmem>>, vector<1x8x128xf32>
    %63 = vector.shape_cast %62 : vector<1x8x128xf32> to vector<8x128xf32>
    %64 = vector.broadcast %1 : f32 to vector<8x128xf32>
    %65 = arith.mulf %63, %64 : vector<8x128xf32>
    %cst_26 = arith.constant dense<0xFF800000> : vector<8xf32>
    %66 = vector.multi_reduction <maximumf>, %65, %cst_26 [1] : vector<8x128xf32> to vector<8xf32>
    %67 = vector.shape_cast %66 : vector<8xf32> to vector<8x1xf32>
    %68 = vector.broadcast %67 : vector<8x1xf32> to vector<8x128xf32>
    %69 = arith.subf %65, %68 : vector<8x128xf32>
    %70 = math.exp %69 : vector<8x128xf32>
    %cst_27 = arith.constant dense<0.000000e+00> : vector<8xf32>
    %71 = vector.multi_reduction <add>, %70, %cst_27 [1] : vector<8x128xf32> to vector<8xf32>
    %72 = vector.shape_cast %71 : vector<8xf32> to vector<8x1xf32>
    %73 = math.log %72 : vector<8x1xf32>
    %74 = arith.addf %60, %69 : vector<8x128xf32>
    %75 = arith.addf %61, %73 : vector<8x1xf32>
    %c3 = arith.constant 3 : index
    %c0_28 = arith.constant 0 : index
    %c0_29 = arith.constant 0 : index
    %76 = vector.load %arg3[%c3, %c0_28, %c0_29] : memref<4x8x128xf32, #tpu.memory_space<vmem>>, vector<1x8x128xf32>
    %77 = vector.shape_cast %76 : vector<1x8x128xf32> to vector<8x128xf32>
    %78 = vector.broadcast %1 : f32 to vector<8x128xf32>
    %79 = arith.mulf %77, %78 : vector<8x128xf32>
    %cst_30 = arith.constant dense<0xFF800000> : vector<8xf32>
    %80 = vector.multi_reduction <maximumf>, %79, %cst_30 [1] : vector<8x128xf32> to vector<8xf32>
    %81 = vector.shape_cast %80 : vector<8xf32> to vector<8x1xf32>
    %82 = vector.broadcast %81 : vector<8x1xf32> to vector<8x128xf32>
    %83 = arith.subf %79, %82 : vector<8x128xf32>
    %84 = math.exp %83 : vector<8x128xf32>
    %cst_31 = arith.constant dense<0.000000e+00> : vector<8xf32>
    %85 = vector.multi_reduction <add>, %84, %cst_31 [1] : vector<8x128xf32> to vector<8xf32>
    %86 = vector.shape_cast %85 : vector<8xf32> to vector<8x1xf32>
    %87 = math.log %86 : vector<8x1xf32>
    %88 = arith.addf %74, %83 : vector<8x128xf32>
    %89 = arith.addf %75, %87 : vector<8x1xf32>
    %90 = arith.subf %88, %43 : vector<8x128xf32>
    %91 = arith.mulf %24, %90 : vector<8x128xf32>
    %cst_32 = arith.constant dense<0.000000e+00> : vector<8xf32>
    %92 = vector.multi_reduction <add>, %91, %cst_32 [1] : vector<8x128xf32> to vector<8xf32>
    %93 = vector.shape_cast %92 : vector<8xf32> to vector<8x1xf32>
    %94 = arith.subf %88, %55 : vector<8x128xf32>
    %95 = arith.mulf %29, %94 : vector<8x128xf32>
    %cst_33 = arith.constant dense<0.000000e+00> : vector<8xf32>
    %96 = vector.multi_reduction <add>, %95, %cst_33 [1] : vector<8x128xf32> to vector<8xf32>
    %97 = vector.shape_cast %96 : vector<8xf32> to vector<8x1xf32>
    %98 = arith.mulf %32, %93 : vector<8x1xf32>
    %99 = arith.subf %89, %47 : vector<8x1xf32>
    %100 = arith.subf %98, %99 : vector<8x1xf32>
    %101 = arith.mulf %35, %97 : vector<8x1xf32>
    %102 = arith.subf %89, %59 : vector<8x1xf32>
    %103 = arith.subf %101, %102 : vector<8x1xf32>
    %104 = arith.addf %100, %103 : vector<8x1xf32>
    %c0_34 = arith.constant 0 : index
    %c0_35 = arith.constant 0 : index
    %105 = vector.load %arg8[%c0_34, %c0_35] : memref<8x1xf32, #tpu.memory_space<vmem>>, vector<8x1xf32>
    %106 = arith.subf %105, %104 : vector<8x1xf32>
    %c0_36 = arith.constant 0 : index
    %c0_37 = arith.constant 0 : index
    %107 = vector.load %arg8[%c0_36, %c0_37] : memref<8x1xf32, #tpu.memory_space<vmem>>, vector<8x1xf32>
    tpu.vector_store %arg8[%c0_36, %c0_37], %106 {strides = array<i32>} : memref<8x1xf32, #tpu.memory_space<vmem>>, vector<8x1xf32>,
    %108 = arith.addf %9, %11 : vector<8x128xf32>
    %c0_38 = arith.constant 0 : index
    %c0_39 = arith.constant 0 : index
    %109 = vector.load %arg9[%c0_38, %c0_39] : memref<8x128xf32, #tpu.memory_space<vmem>>, vector<8x128xf32>
    %110 = vector.shape_cast %108 : vector<8x128xf32> to vector<1x8x128xf32>
    %cst_40 = arith.constant dense<0.000000e+00> : vector<8x128xf32>
    %111 = vector.multi_reduction <add>, %110, %cst_40 [0] : vector<1x8x128xf32> to vector<8x128xf32>
    %112 = arith.addf %109, %111 : vector<8x128xf32>
    %c0_41 = arith.constant 0 : index
    %c0_42 = arith.constant 0 : index
    %113 = vector.load %arg9[%c0_41, %c0_42] : memref<8x128xf32, #tpu.memory_space<vmem>>, vector<8x128xf32>
    tpu.vector_store %arg9[%c0_41, %c0_42], %112 {strides = array<i32>} : memref<8x128xf32, #tpu.memory_space<vmem>>, vector<8x128xf32>,
    %c0_i32_43 = arith.constant 0 : i32
    %114 = arith.cmpi eq, %arg1, %c0_i32_43 : i32
    %115 = arith.extui %114 : i1 to i32
    %c0_i32_44 = arith.constant 0 : i32
    %116 = arith.cmpi ne, %115, %c0_i32_44 : i32
    scf.if %116 {
      %c0_45 = arith.constant 0 : index
      %c0_46 = arith.constant 0 : index
      %117 = vector.load %arg8[%c0_45, %c0_46] : memref<8x1xf32, #tpu.memory_space<vmem>>, vector<8x1xf32>
      %118 = vector.shape_cast %117 : vector<8x1xf32> to vector<1x8x1xf32>
      %cst_47 = arith.constant dense<0.000000e+00> : vector<1xf32>
      %119 = vector.multi_reduction <add>, %118, %cst_47 [1, 2] : vector<1x8x1xf32> to vector<1xf32>
      %120 = vector.shape_cast %119 : vector<1xf32> to vector<1x1x1xf32>
      %121 = vector.extract %120[0, 0, 0] : f32 from vector<1x1x1xf32>
      %122 = vector.broadcast %121 : f32 to vector<1x1xf32>
      %123 = vector.shape_cast %122 : vector<1x1xf32> to vector<1x1x1xf32>
      %c0_48 = arith.constant 0 : index
      %c0_49 = arith.constant 0 : index
      %c0_50 = arith.constant 0 : index
      %124 = vector.load %arg6[%c0_48, %c0_49, %c0_50] : memref<1x1x1xf32, #tpu.memory_space<vmem>>, vector<1x1x1xf32>
      tpu.vector_store %arg6[%c0_48, %c0_49, %c0_50], %123 {strides = array<i32>} : memref<1x1x1xf32, #tpu.memory_space<vmem>>, vector<1x1x1xf32>,
      %c0_51 = arith.constant 0 : index
      %c0_52 = arith.constant 0 : index
      %125 = vector.load %arg9[%c0_51, %c0_52] : memref<8x128xf32, #tpu.memory_space<vmem>>, vector<8x128xf32>
      %cst_53 = arith.constant dense<0.000000e+00> : vector<128xf32>
      %126 = vector.multi_reduction <add>, %125, %cst_53 [0] : vector<8x128xf32> to vector<128xf32>
      %127 = vector.shape_cast %126 : vector<128xf32> to vector<1x128xf32>
      %128 = vector.shape_cast %127 : vector<1x128xf32> to vector<1x1x128xf32>
      %c0_54 = arith.constant 0 : index
      %c0_55 = arith.constant 0 : index
      %c0_56 = arith.constant 0 : index
      %129 = vector.load %arg7[%c0_54, %c0_55, %c0_56] : memref<1x1x128xf32, #tpu.memory_space<vmem>>, vector<1x1x128xf32>
      tpu.vector_store %arg7[%c0_54, %c0_55, %c0_56], %128 {strides = array<i32>} : memref<1x1x128xf32, #tpu.memory_space<vmem>>, vector<1x1x128xf32>,
    } else {
    }
    return
  }
  func.func @transform_0(%arg0: i32, %arg1: i32) -> i32 {
    %c0_i32 = arith.constant 0 : i32
    %c0_i32_0 = arith.constant 0 : i32
    return %c0_i32 : i32
  }
  func.func @transform_1(%arg0: i32, %arg1: i32) -> (i32, i32, i32) {
    %c1_i32 = arith.constant 1 : i32
    %0 = arith.muli %arg0, %c1_i32 : i32
    %1 = arith.addi %0, %arg1 : i32
    %c0_i32 = arith.constant 0 : i32
    %c0_i32_0 = arith.constant 0 : i32
    %c0_i32_1 = arith.constant 0 : i32
    return %c0_i32, %1, %c0_i32_0 : i32, i32, i32
  }
  func.func @transform_2(%arg0: i32, %arg1: i32) -> (i32, i32, i32) {
    %c1_i32 = arith.constant 1 : i32
    %0 = arith.muli %arg0, %c1_i32 : i32
    %1 = arith.addi %0, %arg1 : i32
    %c0_i32 = arith.constant 0 : i32
    %c0_i32_0 = arith.constant 0 : i32
    %c0_i32_1 = arith.constant 0 : i32
    return %c0_i32, %1, %c0_i32_0 : i32, i32, i32
  }
  func.func @transform_3(%arg0: i32, %arg1: i32) -> (i32, i32) {
    %c0_i32 = arith.constant 0 : i32
    %c0_i32_0 = arith.constant 0 : i32
    %c0_i32_1 = arith.constant 0 : i32
    return %c0_i32, %c0_i32_0 : i32, i32
  }
  func.func @transform_4(%arg0: i32, %arg1: i32) -> (i32, i32, i32) {
    %c0_i32 = arith.constant 0 : i32
    %c0_i32_0 = arith.constant 0 : i32
    %c0_i32_1 = arith.constant 0 : i32
    return %arg0, %c0_i32, %c0_i32_0 : i32, i32, i32
  }
  func.func @transform_5(%arg0: i32, %arg1: i32) -> (i32, i32, i32) {
    %c0_i32 = arith.constant 0 : i32
    %c0_i32_0 = arith.constant 0 : i32
    %c0_i32_1 = arith.constant 0 : i32
    return %arg0, %c0_i32, %c0_i32_0 : i32, i32, i32
  }
}

</mosaic_0001>

<llo_original>
// kernel: fn.1
$region0: #{fn.1}
  #allocation0 [shape = 'u32[]', space=smem, size = 0x4, offset = 0x4, fixed_abs, tag = 'smem constant byte address 0x4 - core index']
  #allocation1 [shape = 'u32[72,128]{1,0:T(1,128)}', space=vmem, size = 0x9000, scoped, tag = 'internal scratch']
  #allocation2 [shape = 'f32[8,1]{1,0:T(8,128)}', space=vmem, size = 0x1000, scoped, tag = 'scratch operand']
  #allocation3 [shape = 'f32[8,128]{1,0:T(8,128)}', space=vmem, size = 0x1000, scoped, tag = 'scratch operand']
  %s0 = inlined_call_operand.hbm [shape: f32[2], index: 0, kind: input, shape index: {}]
  %s1 = inlined_call_operand.hbm [shape: f32[4,16,128], index: 1, kind: input, shape index: {}]
  %s2 = inlined_call_operand.hbm [shape: f32[2,16,128], index: 2, kind: input, shape index: {}]
  %s3 = inlined_call_operand.vmem [shape: f32[1,128], index: 3, kind: input, shape index: {}]
  %s4 = inlined_call_operand.vmem [shape: f32[2,1,1], index: 4, kind: output, shape index: {0}]
  %s5 = inlined_call_operand.hbm [shape: f32[2,1,128], index: 5, kind: output, shape index: {1}]
  %6 = xla_tuple %s4, %s5
  %s7 = sld [smem:[#allocation0]]
  $region77: #{fn.1} parent=0
    _
  %s9 = ssub.s32 1, %s7
  %s10 = scalar_select 0, %s9, %s7
  $region1: #{fn.1} parent=0
    #allocation4 [shape = 'u8[512]{0}', space=smem, size = 0x200, scoped, tag = 'input window, operand 0, single buffered']
    #allocation5 [shape = 's32[2]{0}', space=sflag, size = 0x8, scoped, tag = 'scoped memory for fn.1']
    #allocation6 [shape = 's32[2]{0}', space=sflag, size = 0x8, scoped, tag = 'scoped memory for fn.1']
    #allocation7 [shape = 's32[2]{0}', space=sflag, size = 0x8, scoped, tag = 'scoped memory for fn.1']
    #allocation8 [shape = 'u8[32768]{0}', space=vmem, size = 0x8000, scoped, tag = 'input window, operand 1']
    #allocation9 [shape = 'u8[16384]{0}', space=vmem, size = 0x4000, scoped, tag = 'input window, operand 2']
    #allocation10 [shape = 's32[2]{0}', space=sflag, size = 0x8, scoped, tag = 'scoped memory for fn.1']
    #allocation11 [shape = 'u8[1024]{0}', space=vmem, size = 0x400, scoped, tag = 'output window, operand 1']
    %11 = vsyncpa [#allocation7], 0
    %12 = vsyncpa [#allocation5], 0
    %s13 = scalar_lea.sflag [#allocation5], 1
    %14 = vsyncpa %s13, 0
    %15 = vsyncpa [#allocation10], 0
    %s16 = scalar_lea.sflag [#allocation10], 1
    %17 = vsyncpa %s16, 0
    %18 = vsyncpa [#allocation6], 0
    %s19 = scalar_lea.sflag [#allocation6], 1
    %20 = vsyncpa %s19, 0
    loop: start=0, step=1, limit=4
    $region2: #{fn.1} parent=1 // loop_pre_header
      _
    $region3: #{fn.1} parent=1 // loop_header
      %s22 = sphi 0, %s26
      %p23 = scmp.ge.s32.totalorder %s22, 4
      %s29 = sphi 0, %s41
      %s30 = sphi 0, %s37
      %s31 = sphi 0, %s29
      %s32 = sphi 0, %s30
      %s33 = sphi 0, %s31
      %s34 = sphi 0, %s32
      %s42 = sphi 0, %s42
      %s44 = sphi 0, %s42
      %s45 = sphi 0, %s44
      %s59 = sphi 0, %s45
      %s67 = sphi 0, %s69
      %s70 = sphi 0, %s67
      %s71 = sphi 0, %s70
      %s87 = sphi 0, %s71
      %s95 = sphi 0, %s97
      %s98 = sphi 0, %s95
      %s99 = sphi 0, %s98
      %s115 = sphi 0, %s99
      %s119 = sphi 0, %s119
      %s121 = sphi 0, %s119
      %s122 = sphi 0, %s121
      %s136 = sphi 0, %s122
      %s142 = sphi 0, %s144
      %s145 = sphi 0, %s142
      %s146 = sphi 0, %s145
      %s162 = sphi 0, %s146
      %s168 = sphi 0, %s170
      %s171 = sphi 0, %s168
      %s172 = sphi 0, %s171
      %s188 = sphi 0, %s172
    $region4: #{fn.1} parent=1 // loop_header_branch
      %25 = sbr.rel (%p23) target = $region8
    $region5: #{fn.1} parent=1 // loop_body
      %s27 = ssub.s32 %s22, 1
      %s28 = ssub.s32 %s22, 2
      %s35 = sadd.s32 1, %s30
      %p36 = scmp.ge.s32.totalorder %s35, 1
      %s37 = scalar_select %p36, 0, %s35
      %s38 = sadd.s32 1, %s29
      %s39 = scalar_select %p36, %s38, %s29
      %p40 = scmp.ge.s32.totalorder %s39, 2
      %s41 = scalar_select %p40, 0, %s39
      %s43 = sadd.s32 %s42, 1
      %p46 = scmp.eq.s32.totalorder %s22, 1
      %p47 = scmp.ne.s32.totalorder %s42, %s44
      %p48 = scmp.eq.s32.totalorder %s22, 0
      %p49 = por %p47, %p48
      %p50 = scmp.ne.s32.totalorder %s42, %s44
      %p51 = scmp.eq.s32.totalorder %s27, 1
      %p52 = por %p50, %p51
      %p53 = scmp.ne.s32.totalorder %s44, %s45
      %p54 = scmp.eq.s32.totalorder %s27, 0
      %p55 = por %p53, %p54
      %p56 = scmp.ne.s32.totalorder %s44, %s45
      %p57 = scmp.eq.s32.totalorder %s28, 1
      %p58 = por %p56, %p57
      %p60 = scmp.ne.s32.totalorder %s45, %s59
      %p61 = scmp.eq.s32.totalorder %s28, 0
      %p62 = por %p60, %p61
      %s63 = sadd.s32 %s29, %s30
      %s64 = sadd.s32 %s41, %s37
      %s65 = ssub.s32 %s63, %s64
      %p66 = scmp.eq.s32.totalorder %s65, 0
      %s68 = sadd.s32 %s67, 1
      %s69 = scalar_select %p66, %s67, %s68
      %p72 = pneg %p66
      %p73 = scmp.eq.s32.totalorder %s22, 1
      %p74 = por %p72, %p73
      %p75 = scmp.ne.s32.totalorder %s67, %s70
      %p76 = scmp.eq.s32.totalorder %s22, 0
      %p77 = por %p75, %p76
      %p78 = scmp.ne.s32.totalorder %s67, %s70
      %p79 = scmp.eq.s32.totalorder %s27, 1
      %p80 = por %p78, %p79
      %p81 = scmp.ne.s32.totalorder %s70, %s71
      %p82 = scmp.eq.s32.totalorder %s27, 0
      %p83 = por %p81, %p82
      %p84 = scmp.ne.s32.totalorder %s70, %s71
      %p85 = scmp.eq.s32.totalorder %s28, 1
      %p86 = por %p84, %p85
      %p88 = scmp.ne.s32.totalorder %s71, %s87
      %p89 = scmp.eq.s32.totalorder %s28, 0
      %p90 = por %p88, %p89
      %s91 = sadd.s32 %s29, %s30
      %s92 = sadd.s32 %s41, %s37
      %s93 = ssub.s32 %s91, %s92
      %p94 = scmp.eq.s32.totalorder %s93, 0
      %s96 = sadd.s32 %s95, 1
      %s97 = scalar_select %p94, %s95, %s96
      %p100 = pneg %p94
      %p101 = scmp.eq.s32.totalorder %s22, 1
      %p102 = por %p100, %p101
      %p103 = scmp.ne.s32.totalorder %s95, %s98
      %p104 = scmp.eq.s32.totalorder %s22, 0
      %p105 = por %p103, %p104
      %p106 = scmp.ne.s32.totalorder %s95, %s98
      %p107 = scmp.eq.s32.totalorder %s27, 1
      %p108 = por %p106, %p107
      %p109 = scmp.ne.s32.totalorder %s98, %s99
      %p110 = scmp.eq.s32.totalorder %s27, 0
      %p111 = por %p109, %p110
      %p112 = scmp.ne.s32.totalorder %s98, %s99
      %p113 = scmp.eq.s32.totalorder %s28, 1
      %p114 = por %p112, %p113
      %p116 = scmp.ne.s32.totalorder %s99, %s115
      %p117 = scmp.eq.s32.totalorder %s28, 0
      %p118 = por %p116, %p117
      %s120 = sadd.s32 %s119, 1
      %p123 = scmp.eq.s32.totalorder %s22, 1
      %p124 = scmp.ne.s32.totalorder %s119, %s121
      %p125 = scmp.eq.s32.totalorder %s22, 0
      %p126 = por %p124, %p125
      %p127 = scmp.ne.s32.totalorder %s119, %s121
      %p128 = scmp.eq.s32.totalorder %s27, 1
      %p129 = por %p127, %p128
      %p130 = scmp.ne.s32.totalorder %s121, %s122
      %p131 = scmp.eq.s32.totalorder %s27, 0
      %p132 = por %p130, %p131
      %p133 = scmp.ne.s32.totalorder %s121, %s122
      %p134 = scmp.eq.s32.totalorder %s28, 1
      %p135 = por %p133, %p134
      %p137 = scmp.ne.s32.totalorder %s122, %s136
      %p138 = scmp.eq.s32.totalorder %s28, 0
      %p139 = por %p137, %p138
      %s140 = ssub.s32 %s29, %s41
      %p141 = scmp.eq.s32.totalorder %s140, 0
      %s143 = sadd.s32 %s142, 1
      %s144 = scalar_select %p141, %s142, %s143
      %p147 = pneg %p141
      %p148 = scmp.eq.s32.totalorder %s22, 1
      %p149 = por %p147, %p148
      %p150 = scmp.ne.s32.totalorder %s142, %s145
      %p151 = scmp.eq.s32.totalorder %s22, 0
      %p152 = por %p150, %p151
      %p153 = scmp.ne.s32.totalorder %s142, %s145
      %p154 = scmp.eq.s32.totalorder %s27, 1
      %p155 = por %p153, %p154
      %p156 = scmp.ne.s32.totalorder %s145, %s146
      %p157 = scmp.eq.s32.totalorder %s27, 0
      %p158 = por %p156, %p157
      %p159 = scmp.ne.s32.totalorder %s145, %s146
      %p160 = scmp.eq.s32.totalorder %s28, 1
      %p161 = por %p159, %p160
      %p163 = scmp.ne.s32.totalorder %s146, %s162
      %p164 = scmp.eq.s32.totalorder %s28, 0
      %p165 = por %p163, %p164
      %s166 = ssub.s32 %s29, %s41
      %p167 = scmp.eq.s32.totalorder %s166, 0
      %s169 = sadd.s32 %s168, 1
      %s170 = scalar_select %p167, %s168, %s169
      %p173 = pneg %p167
      %p174 = scmp.eq.s32.totalorder %s22, 1
      %p175 = por %p173, %p174
      %p176 = scmp.ne.s32.totalorder %s168, %s171
      %p177 = scmp.eq.s32.totalorder %s22, 0
      %p178 = por %p176, %p177
      %p179 = scmp.ne.s32.totalorder %s168, %s171
      %p180 = scmp.eq.s32.totalorder %s27, 1
      %p181 = por %p179, %p180
      %p182 = scmp.ne.s32.totalorder %s171, %s172
      %p183 = scmp.eq.s32.totalorder %s27, 0
      %p184 = por %p182, %p183
      %p185 = scmp.ne.s32.totalorder %s171, %s172
      %p186 = scmp.eq.s32.totalorder %s28, 1
      %p187 = por %p185, %p186
      %p189 = scmp.ne.s32.totalorder %s172, %s188
      %p190 = scmp.eq.s32.totalorder %s28, 0
      %p191 = por %p189, %p190
      %p192 = scmp.le.s32.totalorder 1, %s22
      %p193 = scmp.lt.s32.totalorder %s22, 3
      %p194 = pnand %p192, %p193
      %p195 = pneg %p194
      // Predicated region
      $region9: #{fn.1} parent=5 // pred_check
        _
      $region10: #{fn.1} parent=5 // pred_check_branch
        %197 = sbr.rel (%p194) target = $region12
      $region11: #{fn.1} parent=5 // pred_region
        %s198 = ssub.s32 %s22, 1
        // Predicated region
        $region13: #{fn.1} parent=11 // pred_check
          %p199 = pneg %p55
        $region14: #{fn.1} parent=11 // pred_check_branch
          %201 = sbr.rel (%p199) target = $region16
        $region15: #{fn.1} parent=11 // pred_region
          %203 = vsyncadd [#allocation7], 0
          %s205 = sshll.u32 %s0, 4
          %s206 = int_to_ptr.hbm [resolvable:$true] %s205
          %208 = dma.hbm_to_smem %s206, 16, [#allocation4], [#allocation7]
        $region16: #{fn.1} parent=11 // pred_fallthru
          _
        // Predicated region
        $region17: #{fn.1} parent=11 // pred_check
          %p209 = pneg %p132
        $region18: #{fn.1} parent=11 // pred_check_branch
          %211 = sbr.rel (%p209) target = $region20
        $region19: #{fn.1} parent=11 // pred_region
          _
        $region20: #{fn.1} parent=11 // pred_fallthru
          _
      $region12: #{fn.1} parent=5 // pred_fallthru
        _
      %p212 = scmp.lt.s32.totalorder %s22, 2
      // Predicated region
      $region21: #{fn.1} parent=5 // pred_check
        %p213 = pneg %p212
      $region22: #{fn.1} parent=5 // pred_check_branch
        %215 = sbr.rel (%p213) target = $region24
      $region23: #{fn.1} parent=5 // pred_region
        // Predicated region
        $region25: #{fn.1} parent=23 // pred_check
          %p216 = pneg %p77
        $region26: #{fn.1} parent=23 // pred_check_branch
          %218 = sbr.rel (%p216) target = $region28
        $region27: #{fn.1} parent=23 // pred_region
          %s219 = sand.u32 %s67, 1
          %s220 = scalar_lea.sflag [#allocation5], %s219
          %s221 = sand.u32 %s67, 1
          %s222 = smul.addr %s221, 32
          %s223 = scalar_lea.vmem [#allocation8], %s222
          %s224 = sadd.s32 %s29, %s30
          %226 = vsyncadd %s220, 0
          %s227 = smul.addr %s224, 8
          %s228 = scalar_lea.hbm %s1, %s227
          %s229 = sshll.u32 %s228, 4
          %s230 = int_to_ptr.hbm [resolvable:$true] %s229
          %s231 = sshll.u32 %s223, 4
          %s232 = int_to_ptr.vmem [resolvable:$true] %s231
          %237 = dma.hbm_to_vmem [thread:$0]  %s230, 512, %s232, %s220, 256, 128, 8
        $region28: #{fn.1} parent=23 // pred_fallthru
          _
        // Predicated region
        $region29: #{fn.1} parent=23 // pred_check
          %p238 = pneg %p105
        $region30: #{fn.1} parent=23 // pred_check_branch
          %240 = sbr.rel (%p238) target = $region32
        $region31: #{fn.1} parent=23 // pred_region
          %s241 = sand.u32 %s95, 1
          %s242 = scalar_lea.sflag [#allocation10], %s241
          %s243 = sand.u32 %s95, 1
          %s244 = smul.addr %s243, 16
          %s245 = scalar_lea.vmem [#allocation9], %s244
          %s246 = sadd.s32 %s29, %s30
          %248 = vsyncadd %s242, 0
          %s249 = smul.addr %s246, 8
          %s250 = scalar_lea.hbm %s2, %s249
          %s251 = sshll.u32 %s250, 4
          %s252 = int_to_ptr.hbm [resolvable:$true] %s251
          %s253 = sshll.u32 %s245, 4
          %s254 = int_to_ptr.vmem [resolvable:$true] %s253
          %259 = dma.hbm_to_vmem [thread:$0]  %s252, 256, %s254, %s242, 256, 128, 8
        $region32: #{fn.1} parent=23 // pred_fallthru
          _
      $region24: #{fn.1} parent=5 // pred_fallthru
        _
      %p260 = scmp.le.s32.totalorder 1, %s22
      %p261 = scmp.lt.s32.totalorder %s22, 3
      %p262 = pnand %p260, %p261
      %p263 = pneg %p262
      // Predicated region
      $region33: #{fn.1} parent=5 // pred_check
        _
      $region34: #{fn.1} parent=5 // pred_check_branch
        %265 = sbr.rel (%p262) target = $region36
      $region35: #{fn.1} parent=5 // pred_region
        %s266 = ssub.s32 %s22, 1
        // Predicated region
        $region37: #{fn.1} parent=35 // pred_check
          %p267 = pneg %p55
        $region38: #{fn.1} parent=35 // pred_check_branch
          %269 = sbr.rel (%p267) target = $region40
        $region39: #{fn.1} parent=35 // pred_region
          %271 = dma.done [#allocation7], 16
        $region40: #{fn.1} parent=35 // pred_fallthru
          _
        %s272 = sand.u32 %s70, 1
        %s273 = scalar_lea.sflag [#allocation5], %s272
        %s274 = sand.u32 %s70, 1
        %s275 = smul.addr %s274, 32
        %s276 = scalar_lea.vmem [#allocation8], %s275
        // Predicated region
        $region41: #{fn.1} parent=35 // pred_check
          %p277 = pneg %p83
        $region42: #{fn.1} parent=35 // pred_check_branch
          %279 = sbr.rel (%p277) target = $region44
        $region43: #{fn.1} parent=35 // pred_region
          %281 = dma.done %s273, 512
        $region44: #{fn.1} parent=35 // pred_fallthru
          _
        %s282 = sand.u32 %s98, 1
        %s283 = scalar_lea.sflag [#allocation10], %s282
        %s284 = sand.u32 %s98, 1
        %s285 = smul.addr %s284, 16
        %s286 = scalar_lea.vmem [#allocation9], %s285
        // Predicated region
        $region45: #{fn.1} parent=35 // pred_check
          %p287 = pneg %p111
        $region46: #{fn.1} parent=35 // pred_check_branch
          %289 = sbr.rel (%p287) target = $region48
        $region47: #{fn.1} parent=35 // pred_region
          %291 = dma.done %s283, 256
        $region48: #{fn.1} parent=35 // pred_fallthru
          _
        %292 = sfence
        %p293 = pneg %p55
        %p294 = pneg %p52
        %s295 = sand.u32 %s70, 1
        %s296 = scalar_lea.sflag [#allocation5], %s295
        %s297 = sand.u32 %s70, 1
        %s298 = smul.addr %s297, 32
        %s299 = scalar_lea.vmem [#allocation8], %s298
        %p300 = pneg %p83
        %p301 = pneg %p80
        %s302 = sand.u32 %s98, 1
        %s303 = scalar_lea.sflag [#allocation10], %s302
        %s304 = sand.u32 %s98, 1
        %s305 = smul.addr %s304, 16
        %s306 = scalar_lea.vmem [#allocation9], %s305
        %p307 = pneg %p111
        %p308 = pneg %p108
        %p309 = pneg %p132
        %p310 = pneg %p129
        %p311 = pneg %p158
        %p312 = pneg %p155
        %p313 = scmp.lt.s32.totalorder %s31, 1
        %s314 = scalar_select %p313, %s31, 1
        %s315 = scalar_lea.vmem %s4, %s314
        %p316 = pneg %p184
        %p317 = pneg %p181
        %s318 = sand.u32 %s171, 1
        %s319 = scalar_lea.sflag [#allocation6], %s318
        %s320 = sand.u32 %s171, 1
        %s321 = scalar_lea.vmem [#allocation11], %s320
        %s322 = sadd.s32 %s31, %s32
        %s323 = sadd.s32 %s31, %s32
        %p324 = scmp.lt.s32.totalorder %s31, 1
        %s325 = scalar_select %p324, %s31, 1
        %s326 = scalar_lea.vmem %s4, %s325
        %s327 = sld [smem:[#allocation4]]
        %v328 = vstv %s327
        %v329 = vrcp.pop %v328
        %v330 = vmul.f32 %v328, %v329
        %v331 = vsub.f32 1.0, %v330
        %v332 = vmul.f32 %v329, %v331
        %v333 = vadd.f32 %v329, %v332
        %vm334 = vweird.f32 %v328
        %vm335 = vweird.f32 %v329
        %vm336 = vmor %vm334, %vm335
        %v337 = vsel %vm336, %v329, %v333
        %v338 = vand.u32 2147483647, %v328
        %vm339 = vcmp.eq.f32.partialorder %v338, 8.507059e+37
        %v340 = vand.u32 %v328, 2147483648
        %v341 = vor.u32 1.1754944e-38, %v340
        %v342 = vsel %vm339, %v341, %v337
        %s343 = vtos %v342
        %s344 = sld [smem:[#allocation4 + $0x1]]
        %v345 = vstv %s344
        %v346 = vrcp.pop %v345
        %v347 = vmul.f32 %v345, %v346
        %v348 = vsub.f32 1.0, %v347
        %v349 = vmul.f32 %v346, %v348
        %v350 = vadd.f32 %v346, %v349
        %vm351 = vweird.f32 %v345
        %vm352 = vweird.f32 %v346
        %vm353 = vmor %vm351, %vm352
        %v354 = vsel %vm353, %v346, %v350
        %v355 = vand.u32 2147483647, %v345
        %vm356 = vcmp.eq.f32.partialorder %v355, 8.507059e+37
        %v357 = vand.u32 %v345, 2147483648
        %v358 = vor.u32 1.1754944e-38, %v357
        %v359 = vsel %vm356, %v358, %v354
        %s360 = vtos %v359
        %p361 = scmp.eq.s32.totalorder %s32, 0
        // Predicated region
        $region49: #{fn.1} parent=35 // pred_check
          %p362 = pneg %p361
        $region50: #{fn.1} parent=35 // pred_check_branch
          %364 = sbr.rel (%p362) target = $region52
        $region51: #{fn.1} parent=35 // pred_region
          %vm365 = vcmask 7168
          %366 = vst.msk [vmem:[#allocation2] sm:$0xff] %vm365, 0.0
          %367 = vst [vmem:[#allocation3] sm:$0xff] 0.0
        $region52: #{fn.1} parent=35 // pred_fallthru
          _
        %v368 = vld [vmem:[%s3] sm:$0x1]
        %v369 = vld [vmem:[%s286] sm:$0xff]
        %s370 = scalar_lea.vmem %s286, 8 [#allocation9]
        %v371 = vld [vmem:[%s370] sm:$0xff]
        %v373 = vperm.slane %v368, 0
        %v375 = vsub.f32 %v369, %v373
        %v376 = vstv %s360
        %v377 = vmul.f32 %v375, %v376
        %v378 = vsub.f32 %v371, %v373
        %v379 = vmul.f32 %v378, %v376
        %380 = vmax.xlane.f32.xlu0 %v377
        %v381 = vpop.xlane.xlu0 %380
        %v382 = vsub.f32 %v377, %v381
        %v383 = vmul.f32 %v382, 1.442695
        %v384 = vpow.pop %v383
        %385 = vmax.xlane.f32.xlu0 %v379
        %v386 = vpop.xlane.xlu0 %385
        %v387 = vsub.f32 %v379, %v386
        %v388 = vmul.f32 %v387, 1.442695
        %v389 = vpow.pop %v388
        %390 = vadd.xlane.f32.xlu0 %v384
        %v391 = vpop.xlane.xlu0 %390
        %v392 = vrcp.pop %v391
        %v393 = vmul.f32 %v391, %v392
        %v394 = vsub.f32 1.0, %v393
        %v395 = vmul.f32 %v392, %v394
        %v396 = vadd.f32 %v392, %v395
        %vm397 = vweird.f32 %v391
        %vm398 = vweird.f32 %v392
        %vm399 = vmor %vm397, %vm398
        %v400 = vsel %vm399, %v392, %v396
        %v401 = vand.u32 2147483647, %v391
        %vm402 = vcmp.eq.f32.partialorder %v401, 8.507059e+37
        %v403 = vand.u32 %v391, 2147483648
        %v404 = vor.u32 1.1754944e-38, %v403
        %v405 = vsel %vm402, %v404, %v400
        %406 = vadd.xlane.f32.xlu0 %v389
        %v407 = vpop.xlane.xlu0 %406
        %v408 = vrcp.pop %v407
        %v409 = vmul.f32 %v407, %v408
        %v410 = vsub.f32 1.0, %v409
        %v411 = vmul.f32 %v408, %v410
        %v412 = vadd.f32 %v408, %v411
        %vm413 = vweird.f32 %v407
        %vm414 = vweird.f32 %v408
        %vm415 = vmor %vm413, %vm414
        %v416 = vsel %vm415, %v408, %v412
        %v417 = vand.u32 2147483647, %v407
        %vm418 = vcmp.eq.f32.partialorder %v417, 8.507059e+37
        %v419 = vand.u32 %v407, 2147483648
        %v420 = vor.u32 1.1754944e-38, %v419
        %v421 = vsel %vm418, %v420, %v416
        %v422 = vld [vmem:[%s276] sm:$0xff]
        %v423 = vstv %s343
        %v424 = vmul.f32 %v422, %v423
        %425 = vmax.xlane.f32.xlu0 %v424
        %v426 = vpop.xlane.xlu0 %425
        %v427 = vsub.f32 %v424, %v426
        %v428 = vmul.f32 %v427, 1.442695
        %v429 = vpow.pop %v428
        %430 = vadd.xlane.f32.xlu0 %v429
        %v431 = vpop.xlane.xlu0 %430
        %v432 = vlog2.pop %v431
        %v433 = vmul.f32 %v432, 0.6931472
        %s434 = scalar_lea.vmem %s276, 8 [#allocation8]
        %v435 = vld [vmem:[%s434] sm:$0xff]
        %v436 = vmul.f32 %v435, %v423
        %437 = vmax.xlane.f32.xlu0 %v436
        %v438 = vpop.xlane.xlu0 %437
        %v439 = vsub.f32 %v436, %v438
        %v440 = vmul.f32 %v439, 1.442695
        %v441 = vpow.pop %v440
        %442 = vadd.xlane.f32.xlu0 %v441
        %v443 = vpop.xlane.xlu0 %442
        %v444 = vlog2.pop %v443
        %v445 = vmul.f32 %v444, 0.6931472
        %v446 = vadd.f32 %v427, %v439
        %v447 = vadd.f32 %v433, %v445
        %s448 = scalar_lea.vmem %s276, 16 [#allocation8]
        %v449 = vld [vmem:[%s448] sm:$0xff]
        %v450 = vmul.f32 %v449, %v423
        %451 = vmax.xlane.f32.xlu0 %v450
        %v452 = vpop.xlane.xlu0 %451
        %v453 = vsub.f32 %v450, %v452
        %v454 = vmul.f32 %v453, 1.442695
        %v455 = vpow.pop %v454
        %456 = vadd.xlane.f32.xlu0 %v455
        %v457 = vpop.xlane.xlu0 %456
        %v458 = vlog2.pop %v457
        %v459 = vmul.f32 %v458, 0.6931472
        %v460 = vadd.f32 %v446, %v453
        %v461 = vadd.f32 %v447, %v459
        %s462 = scalar_lea.vmem %s276, 24 [#allocation8]
        %v463 = vld [vmem:[%s462] sm:$0xff]
        %v464 = vmul.f32 %v463, %v423
        %465 = vmax.xlane.f32.xlu0 %v464
        %v466 = vpop.xlane.xlu0 %465
        %v467 = vsub.f32 %v464, %v466
        %v468 = vmul.f32 %v467, 1.442695
        %v469 = vpow.pop %v468
        %470 = vadd.xlane.f32.xlu0 %v469
        %v471 = vpop.xlane.xlu0 %470
        %v472 = vlog2.pop %v471
        %v473 = vmul.f32 %v472, 0.6931472
        %v474 = vadd.f32 %v460, %v467
        %v475 = vadd.f32 %v461, %v473
        %v476 = vsub.f32 %v474, %v427
        %v477 = vmul.f32 %v384, %v476
        %478 = vadd.xlane.f32.xlu0 %v477
        %v479 = vpop.xlane.xlu0 %478
        %v480 = vsub.f32 %v474, %v439
        %v481 = vmul.f32 %v389, %v480
        %482 = vadd.xlane.f32.xlu0 %v481
        %v483 = vpop.xlane.xlu0 %482
        %v484 = vmul.f32 %v405, %v479
        %v485 = vsub.f32 %v475, %v433
        %v486 = vsub.f32 %v484, %v485
        %v487 = vmul.f32 %v421, %v483
        %v488 = vsub.f32 %v475, %v445
        %v489 = vsub.f32 %v487, %v488
        %v490 = vadd.f32 %v486, %v489
        %v491 = vld [vmem:[#allocation2] sm:$0xff]
        %v492 = vsub.f32 %v491, %v490
        %vm493 = vcmask 7168
        %494 = vst.msk [vmem:[#allocation2] sm:$0xff] %vm493, %v492
        %v495 = vadd.f32 %v369, %v371
        %v496 = vld [vmem:[#allocation3] sm:$0xff]
        %v497 = vadd.f32 %v495, 0.0
        %v498 = vadd.f32 %v496, %v497
        %499 = vst [vmem:[#allocation3] sm:$0xff] %v498
        // Predicated region
        $region53: #{fn.1} parent=35 // pred_check
          %p500 = pneg %p361
        $region54: #{fn.1} parent=35 // pred_check_branch
          %502 = sbr.rel (%p500) target = $region56
        $region55: #{fn.1} parent=35 // pred_region
          %v503 = vld [vmem:[#allocation2] sm:$0xff]
          %v504 = vsel %vm493, %v503, 0.0
          %505 = vadd.xlane.f32.xlu0 %v504
          %v506 = vpop.xlane.xlu0 %505
          %v507 = vrot.slane %v506, 4
          %v508 = vadd.f32 %v506, %v507
          %v509 = vrot.slane %v508, 2
          %v510 = vadd.f32 %v508, %v509
          %v511 = vrot.slane %v510, 1
          %v512 = vadd.f32 %v510, %v511
          %s513 = vtos %v512
          %v514 = vstv %s513
          %vm515 = vcmask 0
          %516 = vst.msk [vmem:[%s326] sm:$0x1] %vm515, %v514
          %v517 = vld [vmem:[#allocation3] sm:$0xff]
          %v518 = vrot.slane %v517, 4
          %v519 = vadd.f32 %v517, %v518
          %v520 = vrot.slane %v519, 2
          %v521 = vadd.f32 %v519, %v520
          %v522 = vrot.slane %v521, 1
          %v523 = vadd.f32 %v521, %v522
          %524 = vst [vmem:[%s321] sm:$0x1] %v523
        $region56: #{fn.1} parent=35 // pred_fallthru
          _
        %p525 = scmp.lt.s32.totalorder %s31, 1
        %s526 = scalar_select %p525, %s31, 1
        %s527 = scalar_lea.vmem %s4, %s526
        %s528 = sand.u32 %s171, 1
        %s529 = scalar_lea.sflag [#allocation6], %s528
        %s530 = sand.u32 %s171, 1
        %s531 = scalar_lea.vmem [#allocation11], %s530
        // Predicated region
        $region57: #{fn.1} parent=35 // pred_check
          %p532 = pneg %p155
        $region58: #{fn.1} parent=35 // pred_check_branch
          %534 = sbr.rel (%p532) target = $region60
        $region59: #{fn.1} parent=35 // pred_region
          _
        $region60: #{fn.1} parent=35 // pred_fallthru
          _
        // Predicated region
        $region61: #{fn.1} parent=35 // pred_check
          %p535 = pneg %p181
        $region62: #{fn.1} parent=35 // pred_check_branch
          %537 = sbr.rel (%p535) target = $region64
        $region63: #{fn.1} parent=35 // pred_region
          %539 = vsyncadd %s529, 0
          %s540 = scalar_lea.hbm %s5, %s31
          %s542 = sshll.u32 %s531, 4
          %s543 = int_to_ptr.vmem [resolvable:$true] %s542
          %s544 = sshll.u32 %s540, 4
          %s545 = int_to_ptr.hbm [resolvable:$true] %s544
          %547 = dma.vmem_to_hbm [thread:$0]  %s543, 16, %s545, %s529
        $region64: #{fn.1} parent=35 // pred_fallthru
          _
      $region36: #{fn.1} parent=5 // pred_fallthru
        _
      %p548 = scmp.le.s32.totalorder 2, %s22
      // Predicated region
      $region65: #{fn.1} parent=5 // pred_check
        %p549 = pneg %p548
      $region66: #{fn.1} parent=5 // pred_check_branch
        %551 = sbr.rel (%p549) target = $region68
      $region67: #{fn.1} parent=5 // pred_region
        %s552 = ssub.s32 %s22, 2
        // Predicated region
        $region69: #{fn.1} parent=67 // pred_check
          %p553 = pneg %p161
        $region70: #{fn.1} parent=67 // pred_check_branch
          %555 = sbr.rel (%p553) target = $region72
        $region71: #{fn.1} parent=67 // pred_region
          %p556 = scmp.lt.s32.totalorder %s33, 1
          %s557 = scalar_select %p556, %s33, 1
          %s558 = scalar_lea.vmem %s4, %s557
        $region72: #{fn.1} parent=67 // pred_fallthru
          _
        // Predicated region
        $region73: #{fn.1} parent=67 // pred_check
          %p559 = pneg %p187
        $region74: #{fn.1} parent=67 // pred_check_branch
          %561 = sbr.rel (%p559) target = $region76
        $region75: #{fn.1} parent=67 // pred_region
          %s562 = sand.u32 %s172, 1
          %s563 = scalar_lea.sflag [#allocation6], %s562
          %s564 = sand.u32 %s172, 1
          %s565 = scalar_lea.vmem [#allocation11], %s564
          %567 = dma.done %s563, 16
        $region76: #{fn.1} parent=67 // pred_fallthru
          _
      $region68: #{fn.1} parent=5 // pred_fallthru
        _
    $region6: #{fn.1} parent=1 // loop_footer
      %s26 = sadd.s32 1, %s22
    $region7: #{fn.1} parent=1 // loop_footer_branch
      %21 = sbr.rel target = $region3
    $region8: #{fn.1} parent=1 // loop_exit
      _
    %568 = vsyncpa [#allocation5], 1
    %s569 = scalar_lea.sflag [#allocation5], 1
    %570 = vsyncpa %s569, 1
    %571 = vsyncpa [#allocation10], 1
    %s572 = scalar_lea.sflag [#allocation10], 1
    %573 = vsyncpa %s572, 1
    %574 = vsyncpa [#allocation6], 1
    %s575 = scalar_lea.sflag [#allocation6], 1
    %576 = vsyncpa %s575, 1
    %577 = vsyncpa [#allocation7], 1
    %s578 = scalar_lea.sflag [#allocation7], 1
    %579 = vsyncpa %s578, 1

</llo_original>
